<compile_context>
chip_gen: v6e
topology: v6e:2x2x1
jax: 0.10.0
libtpu: 0.0.40
codegen_flags: <defaults>
</compile_context>

<pallas_src>
import math

import jax
import jax.numpy as jnp
from jax.experimental import pallas as pl
from jax.experimental.pallas import tpu as pltpu


def _masked_linear_multivariate_kernel(x_ref, y_ref, w_ref, b_ref, o_ref):
    x = x_ref[...]                      # (B_pad, N*T)  f32, 128 lanes
    y = y_ref[...]                      # (B_pad, G)    f32
    num_genres = y_ref.shape[1]         # static, small -> unrolled

    # out[b, :] = sum_g (y[b, g] * x[b, :]) @ W[g]
    # Each dot is an MXU matmul (K = N*T = 128 on lanes, output D*O = 128 on
    # lanes) with f32 accumulation; the genre combine rides on the cheap
    # (B_pad, 128) activation instead of a weight-sized intermediate.
    acc = jnp.dot(y[:, 0:1] * x, w_ref[0], preferred_element_type=jnp.float32)
    for g in range(1, num_genres):
        acc = acc + jnp.dot(y[:, g:g + 1] * x, w_ref[g],
                            preferred_element_type=jnp.float32)

    o_ref[...] = acc + b_ref[...]       # bias (1, D*O) broadcast over batch rows


def masked_linear_multivariate(x, y, weight, mask, bias):
    """x: (B, N, T); y: (B, G); weight: (G, D, O, N, T) [PyTorch layout];
    mask: (O, T); bias: (D*O,).  Returns (B, D, O) float32."""
    B, N, T = x.shape
    G, D, O = weight.shape[0], weight.shape[1], weight.shape[2]
    NT, DO = N * T, D * O

    # --- layout plumbing (single fused XLA pass over the weight) ------------
    # mask multiply (batch-invariant, hoisted out of the kernel) + transpose +
    # flatten:  W3[g, n*T + t, d*O + o] = weight[g, d, o, n, t] * mask[o, t]
    w3 = (weight.astype(jnp.float32)
          * mask.astype(jnp.float32)[None, None, :, None, :])
    w3 = w3.transpose(0, 3, 4, 1, 2).reshape(G, NT, DO)

    bias2 = bias.reshape(1, DO).astype(jnp.float32)

    # Pad batch to a sublane multiple so all blocks are natively (8,128)-tiled.
    Bp = ((B + 7) // 8) * 8
    x2 = jnp.pad(x.reshape(B, NT).astype(jnp.float32), ((0, Bp - B), (0, 0)))
    y2 = jnp.pad(y.astype(jnp.float32), ((0, Bp - B), (0, 0)))

    # Single grid step: everything (~0.5 MiB) lives in VMEM for the whole call.
    # For large B one would add a leading "parallel" batch-tile grid axis; for
    # scaled-up weights on v7x (64 MiB VMEM) one would tile over D*O instead.
    out_flat = pl.pallas_call(
        _masked_linear_multivariate_kernel,
        out_shape=jax.ShapeDtypeStruct((Bp, DO), jnp.float32),
        grid=(1,),
        in_specs=[
            pl.BlockSpec((Bp, NT), lambda i: (0, 0)),        # x, lane-dense
            pl.BlockSpec((Bp, G), lambda i: (0, 0)),         # genre weights
            pl.BlockSpec((G, NT, DO), lambda i: (0, 0, 0)),  # pre-masked weight
            pl.BlockSpec((1, DO), lambda i: (0, 0)),         # bias
        ],
        out_specs=pl.BlockSpec((Bp, DO), lambda i: (0, 0)),  # (8,128) = 1 vreg
        compiler_params=pltpu.CompilerParams(
            dimension_semantics=("arbitrary",)),
    )(x2, y2, w3, bias2)

    return out_flat[:B].reshape(B, D, O)


if __name__ == "__main__":
    # small shapes consistent with the module:
    #   input_size  = (notes_size N=8, timestep_size T=16)
    #   output_size = (notes_out  D=8, timestep_out O=16)
    #   num_genres G=4, batch B=2
    B, G, N, T, D, O = 2, 4, 8, 16, 8, 16

    key = jax.random.PRNGKey(0)
    kw, kb, km, kx, ky = jax.random.split(key, 5)

    # kaiming_uniform_(a=sqrt(5)) on the 5D weight: fan_in = D * O * N * T
    fan_in_w = D * O * N * T
    bound_w = math.sqrt(1.0 / fan_in_w)
    weight = jax.random.uniform(kw, (G, D, O, N, T), jnp.float32,
                                -bound_w, bound_w)

    # bias bound from weight.reshape(G*D, -1): fan_in = O * N * T
    fan_in_b = O * N * T
    bound_b = 1.0 / math.sqrt(fan_in_b)
    bias = jax.random.uniform(kb, (D * O,), jnp.float32, -bound_b, bound_b)

    mask = (jax.random.uniform(km, (O, T)) > 0.5).astype(jnp.float32)  # set_mask
    x = jax.random.normal(kx, (B, N, T), jnp.float32)
    y = jax.nn.softmax(jax.random.normal(ky, (B, G), jnp.float32), axis=-1)

    out = jax.block_until_ready(
        masked_linear_multivariate(x, y, weight, mask, bias))

    # pure-JAX reference mirroring the torch einsums (full-precision f32 dots)
    wm = weight * mask[None, None, :, None, :]                 # 'gdont,ot->gdont'
    gw = jnp.einsum('bg,gdont->bdont', y, wm,
                    precision=jax.lax.Precision.HIGHEST)
    ref = jnp.einsum('bnt,bdont->bdo', x, gw,
                     precision=jax.lax.Precision.HIGHEST)
    ref = ref + bias.reshape(D, O)   # see NOTE on bias broadcast above

    assert out.shape == (B, D, O)
    assert jnp.allclose(out, ref, atol=1e-3, rtol=1e-3), "mismatch vs reference"
    print("KERNEL_OK")
</pallas_src>

<mosaic_0001>
module attributes {stable_mosaic.version = 11 : i64} {
  func.func @_masked_linear_multivariate_kernel(%arg0: i32, %arg1: memref<8x128xf32, #tpu.memory_space<vmem>>, %arg2: memref<8x4xf32, #tpu.memory_space<vmem>>, %arg3: memref<4x128x128xf32, #tpu.memory_space<vmem>>, %arg4: memref<1x128xf32, #tpu.memory_space<vmem>>, %arg5: memref<8x128xf32, #tpu.memory_space<vmem>>) attributes {dimension_semantics = [#tpu.dimension_semantics<arbitrary>], iteration_bounds = array<i64: 1>, scalar_prefetch = 0 : i64, scratch_operands = 0 : i64, tpu.core_type = #tpu.core_type<tc>, window_params = [{pipeline_mode = #tpu.pipeline_mode<synchronous>, transform_indices = @transform_0, window_bounds = array<i64: 8, 128>}, {pipeline_mode = #tpu.pipeline_mode<synchronous>, transform_indices = @transform_1, window_bounds = array<i64: 8, 4>}, {pipeline_mode = #tpu.pipeline_mode<synchronous>, transform_indices = @transform_2, window_bounds = array<i64: 4, 128, 128>}, {pipeline_mode = #tpu.pipeline_mode<synchronous>, transform_indices = @transform_3, window_bounds = array<i64: 1, 128>}, {pipeline_mode = #tpu.pipeline_mode<synchronous>, transform_indices = @transform_4, window_bounds = array<i64: 8, 128>}]} {
    %c0 = arith.constant 0 : index
    %c0_0 = arith.constant 0 : index
    %0 = vector.load %arg1[%c0, %c0_0] : memref<8x128xf32, #tpu.memory_space<vmem>>, vector<8x128xf32>
    %c0_1 = arith.constant 0 : index
    %c0_2 = arith.constant 0 : index
    %1 = vector.load %arg2[%c0_1, %c0_2] : memref<8x4xf32, #tpu.memory_space<vmem>>, vector<8x4xf32>
    %2 = vector.extract_strided_slice %1 {offsets = [0, 0], sizes = [8, 1], strides = [1, 1]} : vector<8x4xf32> to vector<8x1xf32>
    %3 = vector.broadcast %2 : vector<8x1xf32> to vector<8x128xf32>
    %4 = arith.mulf %3, %0 : vector<8x128xf32>
    %c0_3 = arith.constant 0 : index
    %c0_4 = arith.constant 0 : index
    %c0_5 = arith.constant 0 : index
    %5 = vector.load %arg3[%c0_3, %c0_4, %c0_5] : memref<4x128x128xf32, #tpu.memory_space<vmem>>, vector<1x128x128xf32>
    %6 = vector.shape_cast %5 : vector<1x128x128xf32> to vector<128x128xf32>
    %cst = arith.constant dense<0.000000e+00> : vector<8x128xf32>
    %7 = tpu.matmul %4, %6, %cst {dimension_numbers = #tpu.dot_dimension_numbers<[1], [0], [0], [1], [0, 0, 1, 1], [], []>} : vector<8x128xf32>, vector<128x128xf32>, vector<8x128xf32> -> vector<8x128xf32>
    %8 = vector.extract_strided_slice %1 {offsets = [0, 1], sizes = [8, 1], strides = [1, 1]} : vector<8x4xf32> to vector<8x1xf32>
    %9 = vector.broadcast %8 : vector<8x1xf32> to vector<8x128xf32>
    %10 = arith.mulf %9, %0 : vector<8x128xf32>
    %c1 = arith.constant 1 : index
    %c0_6 = arith.constant 0 : index
    %c0_7 = arith.constant 0 : index
    %11 = vector.load %arg3[%c1, %c0_6, %c0_7] : memref<4x128x128xf32, #tpu.memory_space<vmem>>, vector<1x128x128xf32>
    %12 = vector.shape_cast %11 : vector<1x128x128xf32> to vector<128x128xf32>
    %cst_8 = arith.constant dense<0.000000e+00> : vector<8x128xf32>
    %13 = tpu.matmul %10, %12, %cst_8 {dimension_numbers = #tpu.dot_dimension_numbers<[1], [0], [0], [1], [0, 0, 1, 1], [], []>} : vector<8x128xf32>, vector<128x128xf32>, vector<8x128xf32> -> vector<8x128xf32>
    %14 = arith.addf %7, %13 : vector<8x128xf32>
    %15 = vector.extract_strided_slice %1 {offsets = [0, 2], sizes = [8, 1], strides = [1, 1]} : vector<8x4xf32> to vector<8x1xf32>
    %16 = vector.broadcast %15 : vector<8x1xf32> to vector<8x128xf32>
    %17 = arith.mulf %16, %0 : vector<8x128xf32>
    %c2 = arith.constant 2 : index
    %c0_9 = arith.constant 0 : index
    %c0_10 = arith.constant 0 : index
    %18 = vector.load %arg3[%c2, %c0_9, %c0_10] : memref<4x128x128xf32, #tpu.memory_space<vmem>>, vector<1x128x128xf32>
    %19 = vector.shape_cast %18 : vector<1x128x128xf32> to vector<128x128xf32>
    %cst_11 = arith.constant dense<0.000000e+00> : vector<8x128xf32>
    %20 = tpu.matmul %17, %19, %cst_11 {dimension_numbers = #tpu.dot_dimension_numbers<[1], [0], [0], [1], [0, 0, 1, 1], [], []>} : vector<8x128xf32>, vector<128x128xf32>, vector<8x128xf32> -> vector<8x128xf32>
    %21 = arith.addf %14, %20 : vector<8x128xf32>
    %22 = vector.extract_strided_slice %1 {offsets = [0, 3], sizes = [8, 1], strides = [1, 1]} : vector<8x4xf32> to vector<8x1xf32>
    %23 = vector.broadcast %22 : vector<8x1xf32> to vector<8x128xf32>
    %24 = arith.mulf %23, %0 : vector<8x128xf32>
    %c3 = arith.constant 3 : index
    %c0_12 = arith.constant 0 : index
    %c0_13 = arith.constant 0 : index
    %25 = vector.load %arg3[%c3, %c0_12, %c0_13] : memref<4x128x128xf32, #tpu.memory_space<vmem>>, vector<1x128x128xf32>
    %26 = vector.shape_cast %25 : vector<1x128x128xf32> to vector<128x128xf32>
    %cst_14 = arith.constant dense<0.000000e+00> : vector<8x128xf32>
    %27 = tpu.matmul %24, %26, %cst_14 {dimension_numbers = #tpu.dot_dimension_numbers<[1], [0], [0], [1], [0, 0, 1, 1], [], []>} : vector<8x128xf32>, vector<128x128xf32>, vector<8x128xf32> -> vector<8x128xf32>
    %28 = arith.addf %21, %27 : vector<8x128xf32>
    %c0_15 = arith.constant 0 : index
    %c0_16 = arith.constant 0 : index
    %29 = vector.load %arg4[%c0_15, %c0_16] : memref<1x128xf32, #tpu.memory_space<vmem>>, vector<1x128xf32>
    %30 = vector.broadcast %29 : vector<1x128xf32> to vector<8x128xf32>
    %31 = arith.addf %28, %30 : vector<8x128xf32>
    %c0_17 = arith.constant 0 : index
    %c0_18 = arith.constant 0 : index
    %32 = vector.load %arg5[%c0_17, %c0_18] : memref<8x128xf32, #tpu.memory_space<vmem>>, vector<8x128xf32>
    tpu.vector_store %arg5[%c0_17, %c0_18], %31 {strides = array<i32>} : memref<8x128xf32, #tpu.memory_space<vmem>>, vector<8x128xf32>,
    return
  }
  func.func @transform_0(%arg0: i32) -> (i32, i32) {
    %c0_i32 = arith.constant 0 : i32
    %c0_i32_0 = arith.constant 0 : i32
    %c0_i32_1 = arith.constant 0 : i32
    return %c0_i32, %c0_i32_0 : i32, i32
  }
  func.func @transform_1(%arg0: i32) -> (i32, i32) {
    %c0_i32 = arith.constant 0 : i32
    %c0_i32_0 = arith.constant 0 : i32
    %c0_i32_1 = arith.constant 0 : i32
    return %c0_i32, %c0_i32_0 : i32, i32
  }
  func.func @transform_2(%arg0: i32) -> (i32, i32, i32) {
    %c0_i32 = arith.constant 0 : i32
    %c0_i32_0 = arith.constant 0 : i32
    %c0_i32_1 = arith.constant 0 : i32
    %c0_i32_2 = arith.constant 0 : i32
    return %c0_i32, %c0_i32_0, %c0_i32_1 : i32, i32, i32
  }
  func.func @transform_3(%arg0: i32) -> (i32, i32) {
    %c0_i32 = arith.constant 0 : i32
    %c0_i32_0 = arith.constant 0 : i32
    %c0_i32_1 = arith.constant 0 : i32
    return %c0_i32, %c0_i32_0 : i32, i32
  }
  func.func @transform_4(%arg0: i32) -> (i32, i32) {
    %c0_i32 = arith.constant 0 : i32
    %c0_i32_0 = arith.constant 0 : i32
    %c0_i32_1 = arith.constant 0 : i32
    return %c0_i32, %c0_i32_0 : i32, i32
  }
}

</mosaic_0001>

<llo_original>
// kernel: tpu_custom_call.1
$region0: #{tpu_custom_call.1}
  #allocation0 [shape = 'u32[]', space=smem, size = 0x4, offset = 0x4, fixed_abs, tag = 'smem constant byte address 0x4 - core index']
  #allocation1 [shape = 'u32[144,128]{1,0:T(1,128)}', space=vmem, size = 0x12000, scoped, tag = 'internal scratch']
  %s0 = inlined_call_operand.vmem [shape: f32[8,128], index: 0, kind: input, shape index: {}]
  %s1 = inlined_call_operand.vmem [shape: f32[8,4], index: 1, kind: input, shape index: {}]
  %s2 = inlined_call_operand.hbm [shape: f32[4,128,128], index: 2, kind: input, shape index: {}]
  %s3 = inlined_call_operand.vmem [shape: f32[1,128], index: 3, kind: input, shape index: {}]
  %s4 = inlined_call_operand.hbm [shape: f32[8,128], index: 4, kind: output, shape index: {}]
  %s5 = sld [smem:[#allocation0]]
  $region30: #{tpu_custom_call.1} parent=0
    _
  %s7 = ssub.s32 1, %s5
  %s8 = scalar_select 0, %s7, %s5
  $region1: #{tpu_custom_call.1} parent=0
    #allocation2 [shape = 'u8[262144]{0}', space=vmem, size = 0x40000, scoped, tag = 'input window, operand 2, single buffered']
    #allocation3 [shape = 's32[1]{0}', space=sflag, size = 0x4, scoped, tag = 'scoped memory for tpu_custom_call.1']
    #allocation4 [shape = 's32[1]{0}', space=sflag, size = 0x4, scoped, tag = 'scoped memory for tpu_custom_call.1']
    #allocation5 [shape = 'u8[4096]{0}', space=vmem, size = 0x1000, scoped, tag = 'output window, operand 0, single buffered']
    %9 = vsyncpa [#allocation3], 0
    %10 = vsyncpa [#allocation4], 0
    // Predicated region
    $region2: #{tpu_custom_call.1} parent=1 // pred_check
      _
    $region3: #{tpu_custom_call.1} parent=1 // pred_check_branch
      %12 = sbr.rel (0) target = $region5
    $region4: #{tpu_custom_call.1} parent=1 // pred_region
      _
    $region5: #{tpu_custom_call.1} parent=1 // pred_fallthru
      _
    // Predicated region
    $region6: #{tpu_custom_call.1} parent=1 // pred_check
      _
    $region7: #{tpu_custom_call.1} parent=1 // pred_check_branch
      %14 = sbr.rel (0) target = $region9
    $region8: #{tpu_custom_call.1} parent=1 // pred_region
      _
    $region9: #{tpu_custom_call.1} parent=1 // pred_fallthru
      _
    // Predicated region
    $region10: #{tpu_custom_call.1} parent=1 // pred_check
      _
    $region11: #{tpu_custom_call.1} parent=1 // pred_check_branch
      %16 = sbr.rel (0) target = $region13
    $region12: #{tpu_custom_call.1} parent=1 // pred_region
      %s18 = ssub.s32 8192, 8192
      %19 = vsyncadd [#allocation3], %s18
      %s20 = sshll.u32 [#allocation2], 4
      %s21 = int_to_ptr.vmem [resolvable:$true] %s20
      %26 = dma.hbm_to_vmem [thread:$0]  %s2, 8192, %s21, [#allocation3], 128, 128, 8
    $region13: #{tpu_custom_call.1} parent=1 // pred_fallthru
      _
    // Predicated region
    $region14: #{tpu_custom_call.1} parent=1 // pred_check
      _
    $region15: #{tpu_custom_call.1} parent=1 // pred_check_branch
      %28 = sbr.rel (0) target = $region17
    $region16: #{tpu_custom_call.1} parent=1 // pred_region
      _
    $region17: #{tpu_custom_call.1} parent=1 // pred_fallthru
      _
    // Predicated region
    $region18: #{tpu_custom_call.1} parent=1 // pred_check
      _
    $region19: #{tpu_custom_call.1} parent=1 // pred_check_branch
      %30 = sbr.rel (0) target = $region21
    $region20: #{tpu_custom_call.1} parent=1 // pred_region
      %31 = dma.done [#allocation3], 8192
    $region21: #{tpu_custom_call.1} parent=1 // pred_fallthru
      _
    %v32 = vld [vmem:[%s0] sm:$0xff]
    %v33 = vld [vmem:[%s1] sm:$0xff]
    %35 = vset.pattern.permute.xlu0 0
    %36 = vperm.xlu0 %35, %v33
    %v37 = vpop.permute.xlu0 %36
    %v39 = vmul.f32 %v37, %v32
    %v40 = vld [vmem:[#allocation2] sm:$0xff]
    %v41 = vld [vmem:[#allocation2 + $0x8] sm:$0xff]
    %v42 = vld [vmem:[#allocation2 + $0x10] sm:$0xff]
    %v43 = vld [vmem:[#allocation2 + $0x18] sm:$0xff]
    %v44 = vld [vmem:[#allocation2 + $0x20] sm:$0xff]
    %v45 = vld [vmem:[#allocation2 + $0x28] sm:$0xff]
    %v46 = vld [vmem:[#allocation2 + $0x30] sm:$0xff]
    %v47 = vld [vmem:[#allocation2 + $0x38] sm:$0xff]
    %v48 = vld [vmem:[#allocation2 + $0x40] sm:$0xff]
    %v49 = vld [vmem:[#allocation2 + $0x48] sm:$0xff]
    %v50 = vld [vmem:[#allocation2 + $0x50] sm:$0xff]
    %v51 = vld [vmem:[#allocation2 + $0x58] sm:$0xff]
    %v52 = vld [vmem:[#allocation2 + $0x60] sm:$0xff]
    %v53 = vld [vmem:[#allocation2 + $0x68] sm:$0xff]
    %v54 = vld [vmem:[#allocation2 + $0x70] sm:$0xff]
    %v55 = vld [vmem:[#allocation2 + $0x78] sm:$0xff]
    %56 = vset.pattern.permute.xlu0 1
    %57 = vperm.xlu0 %56, %v33
    %v58 = vpop.permute.xlu0 %57
    %v60 = vmul.f32 %v58, %v32
    %s61 = scalar_lea.vmem [#allocation2], 128
    %v62 = vld [vmem:[%s61] sm:$0xff]
    %v63 = vld [vmem:[%s61 + $0x8] sm:$0xff]
    %v64 = vld [vmem:[%s61 + $0x10] sm:$0xff]
    %v65 = vld [vmem:[%s61 + $0x18] sm:$0xff]
    %v66 = vld [vmem:[%s61 + $0x20] sm:$0xff]
    %v67 = vld [vmem:[%s61 + $0x28] sm:$0xff]
    %v68 = vld [vmem:[%s61 + $0x30] sm:$0xff]
    %v69 = vld [vmem:[%s61 + $0x38] sm:$0xff]
    %v70 = vld [vmem:[%s61 + $0x40] sm:$0xff]
    %v71 = vld [vmem:[%s61 + $0x48] sm:$0xff]
    %v72 = vld [vmem:[%s61 + $0x50] sm:$0xff]
    %v73 = vld [vmem:[%s61 + $0x58] sm:$0xff]
    %v74 = vld [vmem:[%s61 + $0x60] sm:$0xff]
    %v75 = vld [vmem:[%s61 + $0x68] sm:$0xff]
    %v76 = vld [vmem:[%s61 + $0x70] sm:$0xff]
    %v77 = vld [vmem:[%s61 + $0x78] sm:$0xff]
    %78 = vmatprep.subr.mxu0 0.0
    %79 = vmatpush1.msra.mxu0 %v77
    %80 = vmatprep.subr.mxu0 0.0
    %81 = vmatpush1.msra.mxu0 %v76
    %82 = vmatprep.subr.mxu0 0.0
    %83 = vmatpush1.msra.mxu0 %v75
    %84 = vmatprep.subr.mxu0 0.0
    %85 = vmatpush1.msra.mxu0 %v74
    %86 = vmatprep.subr.mxu0 0.0
    %87 = vmatpush1.msra.mxu0 %v73
    %88 = vmatprep.subr.mxu0 0.0
    %89 = vmatpush1.msra.mxu0 %v72
    %90 = vmatprep.subr.mxu0 0.0
    %91 = vmatpush1.msra.mxu0 %v71
    %92 = vmatprep.subr.mxu0 0.0
    %93 = vmatpush1.msra.mxu0 %v70
    %94 = vmatprep.subr.mxu0 0.0
    %95 = vmatpush1.msra.mxu0 %v69
    %96 = vmatprep.subr.mxu0 0.0
    %97 = vmatpush1.msra.mxu0 %v68
    %98 = vmatprep.subr.mxu0 0.0
    %99 = vmatpush1.msra.mxu0 %v67
    %100 = vmatprep.subr.mxu0 0.0
    %101 = vmatpush1.msra.mxu0 %v66
    %102 = vmatprep.subr.mxu0 0.0
    %103 = vmatpush1.msra.mxu0 %v65
    %104 = vmatprep.subr.mxu0 0.0
    %105 = vmatpush1.msra.mxu0 %v64
    %106 = vmatprep.subr.mxu0 0.0
    %107 = vmatpush1.msra.mxu0 %v63
    %108 = vmatprep.subr.mxu0 0.0
    %109 = vmatpush1.msra.mxu0 %v62
    %110 = vmatprep.subr.mxu0 0.0
    %111 = vmatpush2.msra.mxu0 0.0
    %112 = vmatprep.subr.mxu0 0.0
    %113 = vmatpush2.msra.mxu0 0.0
    %114 = vmatprep.subr.mxu0 0.0
    %115 = vmatpush2.msra.mxu0 0.0
    %116 = vmatprep.subr.mxu0 0.0
    %117 = vmatpush2.msra.mxu0 0.0
    %118 = vmatprep.subr.mxu0 0.0
    %119 = vmatpush2.msra.mxu0 0.0
    %120 = vmatprep.subr.mxu0 0.0
    %121 = vmatpush2.msra.mxu0 0.0
    %122 = vmatprep.subr.mxu0 0.0
    %123 = vmatpush2.msra.mxu0 0.0
    %124 = vmatprep.subr.mxu0 0.0
    %125 = vmatpush2.msra.mxu0 0.0
    %126 = vmatprep.subr.mxu0 0.0
    %127 = vmatpush2.msra.mxu0 0.0
    %128 = vmatprep.subr.mxu0 0.0
    %129 = vmatpush2.msra.mxu0 0.0
    %130 = vmatprep.subr.mxu0 0.0
    %131 = vmatpush2.msra.mxu0 0.0
    %132 = vmatprep.subr.mxu0 0.0
    %133 = vmatpush2.msra.mxu0 0.0
    %134 = vmatprep.subr.mxu0 0.0
    %135 = vmatpush2.msra.mxu0 0.0
    %136 = vmatprep.subr.mxu0 0.0
    %137 = vmatpush2.msra.mxu0 0.0
    %138 = vmatprep.subr.mxu0 0.0
    %139 = vmatpush2.msra.mxu0 0.0
    %140 = vmatprep.subr.mxu0 0.0
    %141 = vmatpush2.msra.mxu0 0.0
    %142 = vmatprep.mubr.f32.mxu0 0.0
    %143 = vmatmul.mubr.f32.gmra.mxu0 %v60
    %v144 = vpop.f32.mrf.mxu0
    %v145 = vadd.f32 0.0, %v144
    %v146 = vpop.f32.mrf.mxu0
    %147 = vdwg.mxu0
    %148 = vmatprep.subr.mxu0 0.0
    %149 = vmatpush1.msra.mxu0 %v55
    %150 = vmatprep.subr.mxu0 0.0
    %151 = vmatpush1.msra.mxu0 %v54
    %152 = vmatprep.subr.mxu0 0.0
    %153 = vmatpush1.msra.mxu0 %v53
    %154 = vmatprep.subr.mxu0 0.0
    %155 = vmatpush1.msra.mxu0 %v52
    %156 = vmatprep.subr.mxu0 0.0
    %157 = vmatpush1.msra.mxu0 %v51
    %158 = vmatprep.subr.mxu0 0.0
    %159 = vmatpush1.msra.mxu0 %v50
    %160 = vmatprep.subr.mxu0 0.0
    %161 = vmatpush1.msra.mxu0 %v49
    %162 = vmatprep.subr.mxu0 0.0
    %163 = vmatpush1.msra.mxu0 %v48
    %164 = vmatprep.subr.mxu0 0.0
    %165 = vmatpush1.msra.mxu0 %v47
    %166 = vmatprep.subr.mxu0 0.0
    %167 = vmatpush1.msra.mxu0 %v46
    %168 = vmatprep.subr.mxu0 0.0
    %169 = vmatpush1.msra.mxu0 %v45
    %170 = vmatprep.subr.mxu0 0.0
    %171 = vmatpush1.msra.mxu0 %v44
    %172 = vmatprep.subr.mxu0 0.0
    %173 = vmatpush1.msra.mxu0 %v43
    %174 = vmatprep.subr.mxu0 0.0
    %175 = vmatpush1.msra.mxu0 %v42
    %176 = vmatprep.subr.mxu0 0.0
    %177 = vmatpush1.msra.mxu0 %v41
    %178 = vmatprep.subr.mxu0 0.0
    %179 = vmatpush1.msra.mxu0 %v40
    %180 = vmatprep.subr.mxu0 0.0
    %181 = vmatpush2.msra.mxu0 0.0
    %182 = vmatprep.subr.mxu0 0.0
    %183 = vmatpush2.msra.mxu0 0.0
    %184 = vmatprep.subr.mxu0 0.0
    %185 = vmatpush2.msra.mxu0 0.0
    %186 = vmatprep.subr.mxu0 0.0
    %187 = vmatpush2.msra.mxu0 0.0
    %188 = vmatprep.subr.mxu0 0.0
    %189 = vmatpush2.msra.mxu0 0.0
    %190 = vmatprep.subr.mxu0 0.0
    %191 = vmatpush2.msra.mxu0 0.0
    %192 = vmatprep.subr.mxu0 0.0
    %193 = vmatpush2.msra.mxu0 0.0
    %194 = vmatprep.subr.mxu0 0.0
    %195 = vmatpush2.msra.mxu0 0.0
    %196 = vmatprep.subr.mxu0 0.0
    %197 = vmatpush2.msra.mxu0 0.0
    %198 = vmatprep.subr.mxu0 0.0
    %199 = vmatpush2.msra.mxu0 0.0
    %200 = vmatprep.subr.mxu0 0.0
    %201 = vmatpush2.msra.mxu0 0.0
    %202 = vmatprep.subr.mxu0 0.0
    %203 = vmatpush2.msra.mxu0 0.0
    %204 = vmatprep.subr.mxu0 0.0
    %205 = vmatpush2.msra.mxu0 0.0
    %206 = vmatprep.subr.mxu0 0.0
    %207 = vmatpush2.msra.mxu0 0.0
    %208 = vmatprep.subr.mxu0 0.0
    %209 = vmatpush2.msra.mxu0 0.0
    %210 = vmatprep.subr.mxu0 0.0
    %211 = vmatpush2.msra.mxu0 0.0
    %212 = vmatprep.mubr.f32.mxu0 0.0
    %213 = vmatmul.mubr.f32.gmra.mxu0 %v39
    %v214 = vpop.f32.mrf.mxu0
    %v215 = vadd.f32 %v145, %v214
    %v216 = vpop.f32.mrf.mxu0
    %217 = vdwg.mxu0
    %218 = vset.pattern.permute.xlu0 2
    %219 = vperm.xlu0 %218, %v33
    %v220 = vpop.permute.xlu0 %219
    %v222 = vmul.f32 %v220, %v32
    %s223 = scalar_lea.vmem [#allocation2], 256
    %v224 = vld [vmem:[%s223] sm:$0xff]
    %v225 = vld [vmem:[%s223 + $0x8] sm:$0xff]
    %v226 = vld [vmem:[%s223 + $0x10] sm:$0xff]
    %v227 = vld [vmem:[%s223 + $0x18] sm:$0xff]
    %v228 = vld [vmem:[%s223 + $0x20] sm:$0xff]
    %v229 = vld [vmem:[%s223 + $0x28] sm:$0xff]
    %v230 = vld [vmem:[%s223 + $0x30] sm:$0xff]
    %v231 = vld [vmem:[%s223 + $0x38] sm:$0xff]
    %v232 = vld [vmem:[%s223 + $0x40] sm:$0xff]
    %v233 = vld [vmem:[%s223 + $0x48] sm:$0xff]
    %v234 = vld [vmem:[%s223 + $0x50] sm:$0xff]
    %v235 = vld [vmem:[%s223 + $0x58] sm:$0xff]
    %v236 = vld [vmem:[%s223 + $0x60] sm:$0xff]
    %v237 = vld [vmem:[%s223 + $0x68] sm:$0xff]
    %v238 = vld [vmem:[%s223 + $0x70] sm:$0xff]
    %v239 = vld [vmem:[%s223 + $0x78] sm:$0xff]
    %240 = vmatprep.subr.mxu0 0.0
    %241 = vmatpush1.msra.mxu0 %v239
    %242 = vmatprep.subr.mxu0 0.0
    %243 = vmatpush1.msra.mxu0 %v238
    %244 = vmatprep.subr.mxu0 0.0
    %245 = vmatpush1.msra.mxu0 %v237
    %246 = vmatprep.subr.mxu0 0.0
    %247 = vmatpush1.msra.mxu0 %v236
    %248 = vmatprep.subr.mxu0 0.0
    %249 = vmatpush1.msra.mxu0 %v235
    %250 = vmatprep.subr.mxu0 0.0
    %251 = vmatpush1.msra.mxu0 %v234
    %252 = vmatprep.subr.mxu0 0.0
    %253 = vmatpush1.msra.mxu0 %v233
    %254 = vmatprep.subr.mxu0 0.0
    %255 = vmatpush1.msra.mxu0 %v232
    %256 = vmatprep.subr.mxu0 0.0
    %257 = vmatpush1.msra.mxu0 %v231
    %258 = vmatprep.subr.mxu0 0.0
    %259 = vmatpush1.msra.mxu0 %v230
    %260 = vmatprep.subr.mxu0 0.0
    %261 = vmatpush1.msra.mxu0 %v229
    %262 = vmatprep.subr.mxu0 0.0
    %263 = vmatpush1.msra.mxu0 %v228
    %264 = vmatprep.subr.mxu0 0.0
    %265 = vmatpush1.msra.mxu0 %v227
    %266 = vmatprep.subr.mxu0 0.0
    %267 = vmatpush1.msra.mxu0 %v226
    %268 = vmatprep.subr.mxu0 0.0
    %269 = vmatpush1.msra.mxu0 %v225
    %270 = vmatprep.subr.mxu0 0.0
    %271 = vmatpush1.msra.mxu0 %v224
    %272 = vmatprep.subr.mxu0 0.0
    %273 = vmatpush2.msra.mxu0 0.0
    %274 = vmatprep.subr.mxu0 0.0
    %275 = vmatpush2.msra.mxu0 0.0
    %276 = vmatprep.subr.mxu0 0.0
    %277 = vmatpush2.msra.mxu0 0.0
    %278 = vmatprep.subr.mxu0 0.0
    %279 = vmatpush2.msra.mxu0 0.0
    %280 = vmatprep.subr.mxu0 0.0
    %281 = vmatpush2.msra.mxu0 0.0
    %282 = vmatprep.subr.mxu0 0.0
    %283 = vmatpush2.msra.mxu0 0.0
    %284 = vmatprep.subr.mxu0 0.0
    %285 = vmatpush2.msra.mxu0 0.0
    %286 = vmatprep.subr.mxu0 0.0
    %287 = vmatpush2.msra.mxu0 0.0
    %288 = vmatprep.subr.mxu0 0.0
    %289 = vmatpush2.msra.mxu0 0.0
    %290 = vmatprep.subr.mxu0 0.0
    %291 = vmatpush2.msra.mxu0 0.0
    %292 = vmatprep.subr.mxu0 0.0
    %293 = vmatpush2.msra.mxu0 0.0
    %294 = vmatprep.subr.mxu0 0.0
    %295 = vmatpush2.msra.mxu0 0.0
    %296 = vmatprep.subr.mxu0 0.0
    %297 = vmatpush2.msra.mxu0 0.0
    %298 = vmatprep.subr.mxu0 0.0
    %299 = vmatpush2.msra.mxu0 0.0
    %300 = vmatprep.subr.mxu0 0.0
    %301 = vmatpush2.msra.mxu0 0.0
    %302 = vmatprep.subr.mxu0 0.0
    %303 = vmatpush2.msra.mxu0 0.0
    %304 = vmatprep.mubr.f32.mxu0 0.0
    %305 = vmatmul.mubr.f32.gmra.mxu0 %v222
    %v306 = vpop.f32.mrf.mxu0
    %v307 = vadd.f32 0.0, %v306
    %v308 = vpop.f32.mrf.mxu0
    %309 = vdwg.mxu0
    %v310 = vadd.f32 %v215, %v307
    %311 = vset.pattern.permute.xlu0 3
    %312 = vperm.xlu0 %311, %v33
    %v313 = vpop.permute.xlu0 %312
    %v315 = vmul.f32 %v313, %v32
    %s316 = scalar_lea.vmem [#allocation2], 384
    %v317 = vld [vmem:[%s316] sm:$0xff]
    %v318 = vld [vmem:[%s316 + $0x8] sm:$0xff]
    %v319 = vld [vmem:[%s316 + $0x10] sm:$0xff]
    %v320 = vld [vmem:[%s316 + $0x18] sm:$0xff]
    %v321 = vld [vmem:[%s316 + $0x20] sm:$0xff]
    %v322 = vld [vmem:[%s316 + $0x28] sm:$0xff]
    %v323 = vld [vmem:[%s316 + $0x30] sm:$0xff]
    %v324 = vld [vmem:[%s316 + $0x38] sm:$0xff]
    %v325 = vld [vmem:[%s316 + $0x40] sm:$0xff]
    %v326 = vld [vmem:[%s316 + $0x48] sm:$0xff]
    %v327 = vld [vmem:[%s316 + $0x50] sm:$0xff]
    %v328 = vld [vmem:[%s316 + $0x58] sm:$0xff]
    %v329 = vld [vmem:[%s316 + $0x60] sm:$0xff]
    %v330 = vld [vmem:[%s316 + $0x68] sm:$0xff]
    %v331 = vld [vmem:[%s316 + $0x70] sm:$0xff]
    %v332 = vld [vmem:[%s316 + $0x78] sm:$0xff]
    %333 = vmatprep.subr.mxu0 0.0
    %334 = vmatpush1.msra.mxu0 %v332
    %335 = vmatprep.subr.mxu0 0.0
    %336 = vmatpush1.msra.mxu0 %v331
    %337 = vmatprep.subr.mxu0 0.0
    %338 = vmatpush1.msra.mxu0 %v330
    %339 = vmatprep.subr.mxu0 0.0
    %340 = vmatpush1.msra.mxu0 %v329
    %341 = vmatprep.subr.mxu0 0.0
    %342 = vmatpush1.msra.mxu0 %v328
    %343 = vmatprep.subr.mxu0 0.0
    %344 = vmatpush1.msra.mxu0 %v327
    %345 = vmatprep.subr.mxu0 0.0
    %346 = vmatpush1.msra.mxu0 %v326
    %347 = vmatprep.subr.mxu0 0.0
    %348 = vmatpush1.msra.mxu0 %v325
    %349 = vmatprep.subr.mxu0 0.0
    %350 = vmatpush1.msra.mxu0 %v324
    %351 = vmatprep.subr.mxu0 0.0
    %352 = vmatpush1.msra.mxu0 %v323
    %353 = vmatprep.subr.mxu0 0.0
    %354 = vmatpush1.msra.mxu0 %v322
    %355 = vmatprep.subr.mxu0 0.0
    %356 = vmatpush1.msra.mxu0 %v321
    %357 = vmatprep.subr.mxu0 0.0
    %358 = vmatpush1.msra.mxu0 %v320
    %359 = vmatprep.subr.mxu0 0.0
    %360 = vmatpush1.msra.mxu0 %v319
    %361 = vmatprep.subr.mxu0 0.0
    %362 = vmatpush1.msra.mxu0 %v318
    %363 = vmatprep.subr.mxu0 0.0
    %364 = vmatpush1.msra.mxu0 %v317
    %365 = vmatprep.subr.mxu0 0.0
    %366 = vmatpush2.msra.mxu0 0.0
    %367 = vmatprep.subr.mxu0 0.0
    %368 = vmatpush2.msra.mxu0 0.0
    %369 = vmatprep.subr.mxu0 0.0
    %370 = vmatpush2.msra.mxu0 0.0
    %371 = vmatprep.subr.mxu0 0.0
    %372 = vmatpush2.msra.mxu0 0.0
    %373 = vmatprep.subr.mxu0 0.0
    %374 = vmatpush2.msra.mxu0 0.0
    %375 = vmatprep.subr.mxu0 0.0
    %376 = vmatpush2.msra.mxu0 0.0
    %377 = vmatprep.subr.mxu0 0.0
    %378 = vmatpush2.msra.mxu0 0.0
    %379 = vmatprep.subr.mxu0 0.0
    %380 = vmatpush2.msra.mxu0 0.0
    %381 = vmatprep.subr.mxu0 0.0
    %382 = vmatpush2.msra.mxu0 0.0
    %383 = vmatprep.subr.mxu0 0.0
    %384 = vmatpush2.msra.mxu0 0.0
    %385 = vmatprep.subr.mxu0 0.0
    %386 = vmatpush2.msra.mxu0 0.0
    %387 = vmatprep.subr.mxu0 0.0
    %388 = vmatpush2.msra.mxu0 0.0
    %389 = vmatprep.subr.mxu0 0.0
    %390 = vmatpush2.msra.mxu0 0.0
    %391 = vmatprep.subr.mxu0 0.0
    %392 = vmatpush2.msra.mxu0 0.0
    %393 = vmatprep.subr.mxu0 0.0
    %394 = vmatpush2.msra.mxu0 0.0
    %395 = vmatprep.subr.mxu0 0.0
    %396 = vmatpush2.msra.mxu0 0.0
    %397 = vmatprep.mubr.f32.mxu0 0.0
    %398 = vmatmul.mubr.f32.gmra.mxu0 %v315
    %v399 = vpop.f32.mrf.mxu0
    %v400 = vadd.f32 0.0, %v399
    %v401 = vpop.f32.mrf.mxu0
    %402 = vdwg.mxu0
    %v403 = vadd.f32 %v310, %v400
    %v404 = vld [vmem:[%s3] sm:$0x1]
    %v406 = vlaneseq
    %v407 = vshrl.u32 %v406, 7
    %v408 = vsub.s32 0, %v407
    %v409 = vrot.slane %v404, %v408
    %v411 = vadd.f32 %v403, %v409
    %412 = vst [vmem:[#allocation5] sm:$0xff] %v411
    // Predicated region
    $region22: #{tpu_custom_call.1} parent=1 // pred_check
      _
    $region23: #{tpu_custom_call.1} parent=1 // pred_check_branch
      %414 = sbr.rel (0) target = $region25
    $region24: #{tpu_custom_call.1} parent=1 // pred_region
      %s416 = ssub.s32 128, 128
      %417 = vsyncadd [#allocation4], %s416
      %s419 = sshll.u32 [#allocation5], 4
      %s420 = int_to_ptr.vmem [resolvable:$true] %s419
      %422 = dma.vmem_to_hbm [thread:$0]  %s420, 128, %s4, [#allocation4]
    $region25: #{tpu_custom_call.1} parent=1 // pred_fallthru
      _
    // Predicated region
    $region26: #{tpu_custom_call.1} parent=1 // pred_check
      _
    $region27: #{tpu_custom_call.1} parent=1 // pred_check_branch
      %424 = sbr.rel (0) target = $region29
    $region28: #{tpu_custom_call.1} parent=1 // pred_region
      %425 = dma.done [#allocation4], 128
    $region29: #{tpu_custom_call.1} parent=1 // pred_fallthru
      _
    %426 = vsyncpa [#allocation3], 1
    %427 = vsyncpa [#allocation4], 1

</llo_original>
